<compile_context>
chip_gen: v7x
topology: tpu7x:2x2x1
jax: 0.10.0
libtpu: 0.0.40
codegen_flags: <defaults>
</compile_context>

<pallas_src>
import jax
import jax.numpy as jnp
from jax.experimental import pallas as pl
from jax.experimental.pallas import tpu as pltpu


def _make_deconv_kernel(C, use_mxu):
    """y_t[r, l] = sum_ci wT[r, ci] * x_t[ci, l] + b[r],  r = (kh, kw, co)."""

    def kernel(x_ref, wT_ref, b_ref, o_ref):
        if use_mxu:
            # Large-C path: (4*Cout, C) @ (C, L) on the MXU, f32 accumulation.
            acc = jnp.dot(wT_ref[...], x_ref[...],
                          preferred_element_type=jnp.float32)
        else:
            # Small-C path: C VPU broadcast-FMAs over the (4*Cout, L) tile.
            # (v5e has no bf16 VALU -> compute in f32 regardless of input dtype.)
            x = x_ref[...].astype(jnp.float32)       # (C, L) voxels on lanes
            wT = wT_ref[...].astype(jnp.float32)     # (4*Cout, C) tiny, resident
            acc = wT[:, 0:1] * x[0:1, :]             # (4*Cout,1)*(1,L) -> (4*Cout,L)
            for ci in range(1, C):                   # static unroll, C is small
                acc = acc + wT[:, ci:ci + 1] * x[ci:ci + 1, :]
        o_ref[...] = (acc + b_ref[...].astype(jnp.float32)).astype(o_ref.dtype)

    return kernel


def _pick_lane_tile(L, C, Cout, itemsize):
    """Lane-axis (voxel) tile: big (512-2048), multiple of 128 or the full slab."""
    budget = 16 * 1024 * 1024                        # double-buffered in+out blocks
    per_col = 2 * (C + 4 * Cout) * itemsize
    cap = max(128, (budget // per_col) // 128 * 128)
    if L % 128 == 0:
        return min(L, 2048, cap)
    if L <= 1024:
        return L                                     # full slab: always legal
    return min(2048, cap)                            # 128-multiple tiles, masked tail


def upsample_forward(x, feature_map, weight, bias):
    """Equivalent of Upsample.forward(x, feature_Map).

    x:           (N, C, D, H, W)      NCDHW, like PyTorch
    feature_map: (N, C//2, D, 2H, 2W)
    weight:      (C, C//2, 1, 2, 2)   ConvTranspose3d weight layout
    bias:        (C//2,)
    returns:     (N, C, D, 2H, 2W)
    """
    N, C, D, H, W = x.shape
    Cout = weight.shape[1]
    L = D * H * W
    itemsize = jnp.dtype(x.dtype).itemsize

    # ---- free (bitcast) reshape: channels on sublanes, voxels on lanes ----
    x_t = x.reshape(N, C, L)

    # ---- tiny one-time weight/bias packing: row r = kh*2*Cout + kw*Cout + co ----
    wT = jnp.transpose(weight[:, :, 0, :, :], (2, 3, 1, 0)).reshape(4 * Cout, C)
    wT = wT.astype(x.dtype)
    b_col = jnp.tile(bias, 4).reshape(4 * Cout, 1).astype(jnp.float32)

    tl = _pick_lane_tile(L, C, Cout, itemsize)
    grid = (N, pl.cdiv(L, tl))

    cost = pl.CostEstimate(
        flops=2 * N * L * C * 4 * Cout,
        transcendentals=0,
        bytes_accessed=itemsize * (N * C * L + N * 4 * Cout * L
                                   + 4 * Cout * C) + 4 * 4 * Cout,
    )

    y_t = pl.pallas_call(
        _make_deconv_kernel(C, use_mxu=(C >= 128)),
        out_shape=jax.ShapeDtypeStruct((N, 4 * Cout, L), x.dtype),
        grid_spec=pltpu.PrefetchScalarGridSpec(
            num_scalar_prefetch=0,
            grid=grid,
            in_specs=[
                pl.BlockSpec((None, C, tl), lambda n, j: (n, 0, j)),   # voxel tile
                pl.BlockSpec((4 * Cout, C), lambda n, j: (0, 0)),      # packed weights
                pl.BlockSpec((4 * Cout, 1), lambda n, j: (0, 0)),      # bias column
            ],
            out_specs=pl.BlockSpec((None, 4 * Cout, tl), lambda n, j: (n, 0, j)),
        ),
        compiler_params=pltpu.CompilerParams(
            dimension_semantics=("parallel", "parallel"),
            vmem_limit_bytes=48 * 1024 * 1024,
        ),
        cost_estimate=cost,
    )(x_t, wT, b_col)

    # ---- one fused XLA pass: 2x2 pixel-shuffle scatter + channel concat ----
    y = y_t.reshape(N, 2, 2, Cout, D, H, W)              # free reshape
    y = jnp.transpose(y, (0, 3, 4, 5, 1, 6, 2))          # (N, co, D, H, kh, W, kw)
    y = y.reshape(N, Cout, D, 2 * H, 2 * W)              # free reshape
    return jnp.concatenate([y, feature_map], axis=1)


if __name__ == "__main__":
    key = jax.random.PRNGKey(0)
    kx, kf, kw_, kb = jax.random.split(key, 4)

    # Small shapes consistent with the module: channelNum = 4
    N, C, D, H, W = 2, 4, 4, 8, 8
    Cout = C // 2

    x = jax.random.normal(kx, (N, C, D, H, W), dtype=jnp.float32)
    feature_map = jax.random.normal(kf, (N, Cout, D, 2 * H, 2 * W), dtype=jnp.float32)

    # Deterministic parameter init (synthetic, no checkpoint load).
    weight = 0.1 * jax.random.normal(kw_, (C, Cout, 1, 2, 2), dtype=jnp.float32)
    bias = 0.1 * jax.random.normal(kb, (Cout,), dtype=jnp.float32)

    fwd = jax.jit(upsample_forward)
    out = jax.block_until_ready(fwd(x, feature_map, weight, bias))

    # Pure-JAX reference: ConvTranspose3d with kernel==stride (no overlap) + concat.
    ref_deconv = jnp.einsum("ncdhw,cokl->nodhkwl", x, weight[:, :, 0, :, :])
    ref_deconv = ref_deconv.reshape(N, Cout, D, 2 * H, 2 * W) + bias[None, :, None, None, None]
    ref = jnp.concatenate([ref_deconv, feature_map], axis=1)

    assert out.shape == (N, C, D, 2 * H, 2 * W), out.shape
    assert jnp.allclose(out, ref, atol=1e-5, rtol=1e-5)
    print("KERNEL_OK")
</pallas_src>

<mosaic_0001>
module attributes {stable_mosaic.version = 11 : i64} {
  func.func @kernel(%arg0: i32, %arg1: i32, %arg2: memref<1x4x256xf32, #tpu.memory_space<vmem>>, %arg3: memref<8x4xf32, #tpu.memory_space<vmem>>, %arg4: memref<8x1xf32, #tpu.memory_space<vmem>>, %arg5: memref<1x8x256xf32, #tpu.memory_space<vmem>>) attributes {dimension_semantics = [#tpu.dimension_semantics<parallel>, #tpu.dimension_semantics<parallel>], iteration_bounds = array<i64: 2, 1>, scalar_prefetch = 0 : i64, scratch_operands = 0 : i64, tpu.core_type = #tpu.core_type<tc>, window_params = [{transform_indices = @transform_0, window_bounds = array<i64: 1, 4, 256>}, {pipeline_mode = #tpu.pipeline_mode<synchronous>, transform_indices = @transform_1, window_bounds = array<i64: 8, 4>}, {pipeline_mode = #tpu.pipeline_mode<synchronous>, transform_indices = @transform_2, window_bounds = array<i64: 8, 1>}, {transform_indices = @transform_3, window_bounds = array<i64: 1, 8, 256>}]} {
    %c0 = arith.constant 0 : index
    %c0_0 = arith.constant 0 : index
    %c0_1 = arith.constant 0 : index
    %0 = vector.load %arg2[%c0, %c0_0, %c0_1] : memref<1x4x256xf32, #tpu.memory_space<vmem>>, vector<1x4x256xf32>
    %1 = vector.shape_cast %0 : vector<1x4x256xf32> to vector<4x256xf32>
    %c0_2 = arith.constant 0 : index
    %c0_3 = arith.constant 0 : index
    %2 = vector.load %arg3[%c0_2, %c0_3] : memref<8x4xf32, #tpu.memory_space<vmem>>, vector<8x4xf32>
    %3 = vector.extract_strided_slice %2 {offsets = [0, 0], sizes = [8, 1], strides = [1, 1]} : vector<8x4xf32> to vector<8x1xf32>
    %4 = vector.extract_strided_slice %1 {offsets = [0, 0], sizes = [1, 256], strides = [1, 1]} : vector<4x256xf32> to vector<1x256xf32>
    %5 = vector.broadcast %3 : vector<8x1xf32> to vector<8x256xf32>
    %6 = vector.broadcast %4 : vector<1x256xf32> to vector<8x256xf32>
    %7 = arith.mulf %5, %6 : vector<8x256xf32>
    %8 = vector.extract_strided_slice %2 {offsets = [0, 1], sizes = [8, 1], strides = [1, 1]} : vector<8x4xf32> to vector<8x1xf32>
    %9 = vector.extract_strided_slice %1 {offsets = [1, 0], sizes = [1, 256], strides = [1, 1]} : vector<4x256xf32> to vector<1x256xf32>
    %10 = vector.broadcast %8 : vector<8x1xf32> to vector<8x256xf32>
    %11 = vector.broadcast %9 : vector<1x256xf32> to vector<8x256xf32>
    %12 = arith.mulf %10, %11 : vector<8x256xf32>
    %13 = arith.addf %7, %12 : vector<8x256xf32>
    %14 = vector.extract_strided_slice %2 {offsets = [0, 2], sizes = [8, 1], strides = [1, 1]} : vector<8x4xf32> to vector<8x1xf32>
    %15 = vector.extract_strided_slice %1 {offsets = [2, 0], sizes = [1, 256], strides = [1, 1]} : vector<4x256xf32> to vector<1x256xf32>
    %16 = vector.broadcast %14 : vector<8x1xf32> to vector<8x256xf32>
    %17 = vector.broadcast %15 : vector<1x256xf32> to vector<8x256xf32>
    %18 = arith.mulf %16, %17 : vector<8x256xf32>
    %19 = arith.addf %13, %18 : vector<8x256xf32>
    %20 = vector.extract_strided_slice %2 {offsets = [0, 3], sizes = [8, 1], strides = [1, 1]} : vector<8x4xf32> to vector<8x1xf32>
    %21 = vector.extract_strided_slice %1 {offsets = [3, 0], sizes = [1, 256], strides = [1, 1]} : vector<4x256xf32> to vector<1x256xf32>
    %22 = vector.broadcast %20 : vector<8x1xf32> to vector<8x256xf32>
    %23 = vector.broadcast %21 : vector<1x256xf32> to vector<8x256xf32>
    %24 = arith.mulf %22, %23 : vector<8x256xf32>
    %25 = arith.addf %19, %24 : vector<8x256xf32>
    %c0_4 = arith.constant 0 : index
    %c0_5 = arith.constant 0 : index
    %26 = vector.load %arg4[%c0_4, %c0_5] : memref<8x1xf32, #tpu.memory_space<vmem>>, vector<8x1xf32>
    %27 = vector.broadcast %26 : vector<8x1xf32> to vector<8x256xf32>
    %28 = arith.addf %25, %27 : vector<8x256xf32>
    %c0_6 = arith.constant 0 : index
    %c0_7 = arith.constant 0 : index
    %c0_8 = arith.constant 0 : index
    %29 = vector.load %arg5[%c0_6, %c0_7, %c0_8] : memref<1x8x256xf32, #tpu.memory_space<vmem>>, vector<1x8x256xf32>
    %30 = vector.shape_cast %29 : vector<1x8x256xf32> to vector<8x256xf32>
    %31 = vector.shape_cast %28 : vector<8x256xf32> to vector<1x8x256xf32>
    tpu.vector_store %arg5[%c0_6, %c0_7, %c0_8], %31 {strides = array<i32>} : memref<1x8x256xf32, #tpu.memory_space<vmem>>, vector<1x8x256xf32>,
    return
  }
  func.func @transform_0(%arg0: i32, %arg1: i32) -> (i32, i32, i32) {
    %c0_i32 = arith.constant 0 : i32
    %c0_i32_0 = arith.constant 0 : i32
    return %arg0, %c0_i32, %arg1 : i32, i32, i32
  }
  func.func @transform_1(%arg0: i32, %arg1: i32) -> (i32, i32) {
    %c0_i32 = arith.constant 0 : i32
    %c0_i32_0 = arith.constant 0 : i32
    %c0_i32_1 = arith.constant 0 : i32
    return %c0_i32, %c0_i32_0 : i32, i32
  }
  func.func @transform_2(%arg0: i32, %arg1: i32) -> (i32, i32) {
    %c0_i32 = arith.constant 0 : i32
    %c0_i32_0 = arith.constant 0 : i32
    %c0_i32_1 = arith.constant 0 : i32
    return %c0_i32, %c0_i32_0 : i32, i32
  }
  func.func @transform_3(%arg0: i32, %arg1: i32) -> (i32, i32, i32) {
    %c0_i32 = arith.constant 0 : i32
    %c0_i32_0 = arith.constant 0 : i32
    return %arg0, %c0_i32, %arg1 : i32, i32, i32
  }
}

</mosaic_0001>

<llo_original>
// kernel: tile.0
$region0: #{tile.0}
  %s0 = inlined_call_operand.vmem [shape: f32[4,2], index: 0, kind: input, shape index: {}]
  %s1 = inlined_call_operand.vmem [shape: f32[8,1], index: 1, kind: output, shape index: {}]
  $region1: #{tile.0} parent=0
    #allocation0 [shape = 'u8[4096]{0}', space=vmem, size = 0x1000, scoped, tag = 'scoped mem for input reshape']
    %s3 = sshllo.u32 0, 4
    %v4 = vld [vmem:[%s0] sm:%s3]
    %5 = vst [vmem:[#allocation0] sm:%s3] %v4
    %v6 = vld [vmem:[#allocation0] sm:$0xf]
    %vm7 = vcmask 7168
    %8 = vst.msk [vmem:[%s1] ss:$2 sm:$0xf] %vm7, %v6
    %v9 = vld [vmem:[#allocation0] sm:$0xf]
    %10 = vrot.lane.b32.xlu0 %v9, 127
    %v11 = vpop.permute.xlu0 %10
    %vm12 = vcmask 7168
    %s13 = scalar_lea.vmem %s1, 1
    %14 = vst.msk [vmem:[%s13] ss:$2 sm:$0xf] %vm12, %v11

// kernel: tile.8
$region0: #{tile.8}
  #allocation0 [shape = 's32[1]{0}', space=sflag, size = 0x4, scoped, tag = 'scoped memory for tile.8']
  %s0 = inlined_call_operand.vmem [shape: f32[2], index: 0, kind: input, shape index: {}]
  %s1 = inlined_call_operand.vmem [shape: f32[4,2], index: 1, kind: output, shape index: {}]
  // Predicated region
  $region2: #{tile.8} parent=0 // pred_check
    _
  $region3: #{tile.8} parent=0 // pred_check_branch
    %3 = sbr.rel (0) target = $region5
  $region4: #{tile.8} parent=0 // pred_region
    _
  $region5: #{tile.8} parent=0 // pred_fallthru
    _
  %v4 = vld [vmem:[%s0] ss:$0 sm:$0xff]
  %5 = vst [vmem:[%s1] sm:$0xf] %v4

// kernel: upsample_forward.1
$region0: #{upsample_forward.1}
  #allocation0 [shape = 'u32[]', space=smem, size = 0x4, offset = 0x4, fixed_abs, tag = 'smem constant byte address 0x4 - core index']
  #allocation1 [shape = 'u32[144,128]{1,0:T(1,128)}', space=vmem, size = 0x12000, scoped, tag = 'internal scratch']
  %s0 = inlined_call_operand.vmem [shape: f32[2,4,256], index: 0, kind: input, shape index: {}]
  %s1 = inlined_call_operand.vmem [shape: f32[8,4], index: 1, kind: input, shape index: {}]
  %s2 = inlined_call_operand.vmem [shape: f32[8,1], index: 2, kind: input, shape index: {}]
  %s3 = inlined_call_operand.vmem [shape: f32[2,8,256], index: 3, kind: output, shape index: {}]
  %s4 = sld [smem:[#allocation0]]
  $region45: #{upsample_forward.1} parent=0
    _
  %s6 = ssub.s32 1, %s4
  %s7 = scalar_select 0, %s6, %s4
  loop: start=0, step=1, limit=4
  $region2: #{upsample_forward.1} parent=0 // loop_pre_header
    _
  $region3: #{upsample_forward.1} parent=0 // loop_header
    %s9 = sphi 0, %s13
    %p10 = scmp.ge.s32.totalorder %s9, 4
    %s16 = sphi 0, %s28
    %s17 = sphi 0, %s24
    %s18 = sphi 0, %s16
    %s19 = sphi 0, %s17
    %s20 = sphi 0, %s18
    %s21 = sphi 0, %s19
    %s33 = sphi 0, %s35
    %s36 = sphi 0, %s33
    %s37 = sphi 0, %s36
    %s53 = sphi 0, %s37
    %s57 = sphi 0, %s57
    %s59 = sphi 0, %s57
    %s60 = sphi 0, %s59
    %s74 = sphi 0, %s60
    %s78 = sphi 0, %s78
    %s80 = sphi 0, %s78
    %s81 = sphi 0, %s80
    %s95 = sphi 0, %s81
    %s103 = sphi 0, %s105
    %s106 = sphi 0, %s103
    %s107 = sphi 0, %s106
    %s123 = sphi 0, %s107
  $region4: #{upsample_forward.1} parent=0 // loop_header_branch
    %12 = sbr.rel (%p10) target = $region8
  $region5: #{upsample_forward.1} parent=0 // loop_body
    %s14 = ssub.s32 %s9, 1
    %s15 = ssub.s32 %s9, 2
    %s22 = sadd.s32 1, %s17
    %p23 = scmp.ge.s32.totalorder %s22, 1
    %s24 = scalar_select %p23, 0, %s22
    %s25 = sadd.s32 1, %s16
    %s26 = scalar_select %p23, %s25, %s16
    %p27 = scmp.ge.s32.totalorder %s26, 2
    %s28 = scalar_select %p27, 0, %s26
    %s29 = ssub.s32 %s16, %s28
    %s30 = ssub.s32 %s17, %s24
    %s31 = sor.u32 %s29, %s30
    %p32 = scmp.eq.s32.totalorder %s31, 0
    %s34 = sadd.s32 %s33, 1
    %s35 = scalar_select %p32, %s33, %s34
    %p38 = pneg %p32
    %p39 = scmp.eq.s32.totalorder %s9, 1
    %p40 = por %p38, %p39
    %p41 = scmp.ne.s32.totalorder %s33, %s36
    %p42 = scmp.eq.s32.totalorder %s9, 0
    %p43 = por %p41, %p42
    %p44 = scmp.ne.s32.totalorder %s33, %s36
    %p45 = scmp.eq.s32.totalorder %s14, 1
    %p46 = por %p44, %p45
    %p47 = scmp.ne.s32.totalorder %s36, %s37
    %p48 = scmp.eq.s32.totalorder %s14, 0
    %p49 = por %p47, %p48
    %p50 = scmp.ne.s32.totalorder %s36, %s37
    %p51 = scmp.eq.s32.totalorder %s15, 1
    %p52 = por %p50, %p51
    %p54 = scmp.ne.s32.totalorder %s37, %s53
    %p55 = scmp.eq.s32.totalorder %s15, 0
    %p56 = por %p54, %p55
    %s58 = sadd.s32 %s57, 1
    %p61 = scmp.eq.s32.totalorder %s9, 1
    %p62 = scmp.ne.s32.totalorder %s57, %s59
    %p63 = scmp.eq.s32.totalorder %s9, 0
    %p64 = por %p62, %p63
    %p65 = scmp.ne.s32.totalorder %s57, %s59
    %p66 = scmp.eq.s32.totalorder %s14, 1
    %p67 = por %p65, %p66
    %p68 = scmp.ne.s32.totalorder %s59, %s60
    %p69 = scmp.eq.s32.totalorder %s14, 0
    %p70 = por %p68, %p69
    %p71 = scmp.ne.s32.totalorder %s59, %s60
    %p72 = scmp.eq.s32.totalorder %s15, 1
    %p73 = por %p71, %p72
    %p75 = scmp.ne.s32.totalorder %s60, %s74
    %p76 = scmp.eq.s32.totalorder %s15, 0
    %p77 = por %p75, %p76
    %s79 = sadd.s32 %s78, 1
    %p82 = scmp.eq.s32.totalorder %s9, 1
    %p83 = scmp.ne.s32.totalorder %s78, %s80
    %p84 = scmp.eq.s32.totalorder %s9, 0
    %p85 = por %p83, %p84
    %p86 = scmp.ne.s32.totalorder %s78, %s80
    %p87 = scmp.eq.s32.totalorder %s14, 1
    %p88 = por %p86, %p87
    %p89 = scmp.ne.s32.totalorder %s80, %s81
    %p90 = scmp.eq.s32.totalorder %s14, 0
    %p91 = por %p89, %p90
    %p92 = scmp.ne.s32.totalorder %s80, %s81
    %p93 = scmp.eq.s32.totalorder %s15, 1
    %p94 = por %p92, %p93
    %p96 = scmp.ne.s32.totalorder %s81, %s95
    %p97 = scmp.eq.s32.totalorder %s15, 0
    %p98 = por %p96, %p97
    %s99 = ssub.s32 %s16, %s28
    %s100 = ssub.s32 %s17, %s24
    %s101 = sor.u32 %s99, %s100
    %p102 = scmp.eq.s32.totalorder %s101, 0
    %s104 = sadd.s32 %s103, 1
    %s105 = scalar_select %p102, %s103, %s104
    %p108 = pneg %p102
    %p109 = scmp.eq.s32.totalorder %s9, 1
    %p110 = por %p108, %p109
    %p111 = scmp.ne.s32.totalorder %s103, %s106
    %p112 = scmp.eq.s32.totalorder %s9, 0
    %p113 = por %p111, %p112
    %p114 = scmp.ne.s32.totalorder %s103, %s106
    %p115 = scmp.eq.s32.totalorder %s14, 1
    %p116 = por %p114, %p115
    %p117 = scmp.ne.s32.totalorder %s106, %s107
    %p118 = scmp.eq.s32.totalorder %s14, 0
    %p119 = por %p117, %p118
    %p120 = scmp.ne.s32.totalorder %s106, %s107
    %p121 = scmp.eq.s32.totalorder %s15, 1
    %p122 = por %p120, %p121
    %p124 = scmp.ne.s32.totalorder %s107, %s123
    %p125 = scmp.eq.s32.totalorder %s15, 0
    %p126 = por %p124, %p125
    %p127 = scmp.le.s32.totalorder 1, %s9
    %p128 = scmp.lt.s32.totalorder %s9, 3
    %p129 = pnand %p127, %p128
    %p130 = pneg %p129
    // Predicated region
    $region9: #{upsample_forward.1} parent=5 // pred_check
      _
    $region10: #{upsample_forward.1} parent=5 // pred_check_branch
      %132 = sbr.rel (%p129) target = $region12
    $region11: #{upsample_forward.1} parent=5 // pred_region
      %s133 = ssub.s32 %s9, 1
      // Predicated region
      $region13: #{upsample_forward.1} parent=11 // pred_check
        %p134 = pneg %p70
      $region14: #{upsample_forward.1} parent=11 // pred_check_branch
        %136 = sbr.rel (%p134) target = $region16
      $region15: #{upsample_forward.1} parent=11 // pred_region
        _
      $region16: #{upsample_forward.1} parent=11 // pred_fallthru
        _
      // Predicated region
      $region17: #{upsample_forward.1} parent=11 // pred_check
        %p137 = pneg %p91
      $region18: #{upsample_forward.1} parent=11 // pred_check_branch
        %139 = sbr.rel (%p137) target = $region20
      $region19: #{upsample_forward.1} parent=11 // pred_region
        _
      $region20: #{upsample_forward.1} parent=11 // pred_fallthru
        _
    $region12: #{upsample_forward.1} parent=5 // pred_fallthru
      _
    %p140 = scmp.lt.s32.totalorder %s9, 2
    // Predicated region
    $region21: #{upsample_forward.1} parent=5 // pred_check
      %p141 = pneg %p140
    $region22: #{upsample_forward.1} parent=5 // pred_check_branch
      %143 = sbr.rel (%p141) target = $region24
    $region23: #{upsample_forward.1} parent=5 // pred_region
      // Predicated region
      $region25: #{upsample_forward.1} parent=23 // pred_check
        %p144 = pneg %p43
      $region26: #{upsample_forward.1} parent=23 // pred_check_branch
        %146 = sbr.rel (%p144) target = $region28
      $region27: #{upsample_forward.1} parent=23 // pred_region
        %s147 = smul.u32 2, %s17
        %p148 = scmp.lt.s32.totalorder %s16, 1
        %s149 = scalar_select %p148, %s16, 1
        %p150 = scmp.lt.s32.totalorder %s147, 1
        %s151 = scalar_select %p150, %s147, 1
        %s152 = smul.addr %s149, 2
        %s153 = sadd.s32 %s151, %s152
        %s154 = smul.addr %s153, 4
        %s155 = scalar_lea.vmem %s0, %s154
        %s156 = smul.u32 2, %s17
      $region28: #{upsample_forward.1} parent=23 // pred_fallthru
        _
    $region24: #{upsample_forward.1} parent=5 // pred_fallthru
      _
    %p157 = scmp.le.s32.totalorder 1, %s9
    %p158 = scmp.lt.s32.totalorder %s9, 3
    %p159 = pnand %p157, %p158
    %p160 = pneg %p159
    // Predicated region
    $region29: #{upsample_forward.1} parent=5 // pred_check
      _
    $region30: #{upsample_forward.1} parent=5 // pred_check_branch
      %162 = sbr.rel (%p159) target = $region32
    $region31: #{upsample_forward.1} parent=5 // pred_region
      %s163 = ssub.s32 %s9, 1
      %s164 = smul.u32 2, %s19
      %p165 = scmp.lt.s32.totalorder %s18, 1
      %s166 = scalar_select %p165, %s18, 1
      %p167 = scmp.lt.s32.totalorder %s164, 1
      %s168 = scalar_select %p167, %s164, 1
      %s169 = smul.addr %s166, 2
      %s170 = sadd.s32 %s168, %s169
      %s171 = smul.addr %s170, 4
      %s172 = scalar_lea.vmem %s0, %s171
      %p173 = pneg %p49
      %p174 = pneg %p46
      %p175 = pneg %p70
      %p176 = pneg %p67
      %p177 = pneg %p91
      %p178 = pneg %p88
      %p179 = pneg %p119
      %p180 = pneg %p116
      %s181 = smul.u32 2, %s19
      %p182 = scmp.lt.s32.totalorder %s18, 1
      %s183 = scalar_select %p182, %s18, 1
      %p184 = scmp.lt.s32.totalorder %s181, 1
      %s185 = scalar_select %p184, %s181, 1
      %s186 = smul.addr %s183, 2
      %s187 = sadd.s32 %s185, %s186
      %s188 = smul.addr %s187, 8
      %s189 = scalar_lea.vmem %s3, %s188
      %s190 = smul.u32 2, %s19
      %p191 = scmp.lt.s32.totalorder %s18, 1
      %s192 = scalar_select %p191, %s18, 1
      %p193 = scmp.lt.s32.totalorder %s190, 1
      %s194 = scalar_select %p193, %s190, 1
      %s195 = smul.addr %s192, 2
      %s196 = sadd.s32 %s194, %s195
      %s197 = smul.addr %s196, 4
      %s198 = scalar_lea.vmem %s0, %s197
      %s199 = smul.u32 2, %s19
      %s200 = smul.u32 2, %s19
      %p201 = scmp.lt.s32.totalorder %s18, 1
      %s202 = scalar_select %p201, %s18, 1
      %p203 = scmp.lt.s32.totalorder %s200, 1
      %s204 = scalar_select %p203, %s200, 1
      %s205 = smul.addr %s202, 2
      %s206 = sadd.s32 %s204, %s205
      %s207 = smul.addr %s206, 8
      %s208 = scalar_lea.vmem %s3, %s207
      %s209 = smul.u32 2, %s19
      %v210 = vld [vmem:[%s198] sm:$0xff]
      %v211 = vld [vmem:[%s1] sm:$0xff]
      %213 = vset.pattern.permute.xlu0 0
      %214 = vperm.xlu0 %213, %v211
      %v215 = vpop.permute.xlu0 %214
      %v218 = vlaneseq
      %v219 = vshrl.u32 %v218, 7
      %v220 = vsub.s32 0, %v219
      %v221 = vrot.slane %v210, %v220
      %v222 = vlaneseq
      %v223 = vshrl.u32 %v222, 7
      %v224 = vsub.s32 4, %v223
      %v225 = vrot.slane %v210, %v224
      %v228 = vlaneseq
      %v229 = vshrl.u32 %v228, 7
      %v230 = vsub.s32 0, %v229
      %v231 = vrot.slane %v221, %v230
      %v232 = vlaneseq
      %v233 = vshrl.u32 %v232, 7
      %v234 = vsub.s32 0, %v233
      %v235 = vrot.slane %v225, %v234
      %v236 = vmul.f32 %v215, %v231
      %v237 = vmul.f32 %v215, %v235
      %238 = vset.pattern.permute.xlu0 1
      %239 = vperm.xlu0 %238, %v211
      %v240 = vpop.permute.xlu0 %239
      %v242 = vlaneseq
      %v243 = vshrl.u32 %v242, 7
      %v244 = vsub.s32 1, %v243
      %v245 = vrot.slane %v210, %v244
      %v246 = vlaneseq
      %v247 = vshrl.u32 %v246, 7
      %v248 = vsub.s32 5, %v247
      %v249 = vrot.slane %v210, %v248
      %v252 = vlaneseq
      %v253 = vshrl.u32 %v252, 7
      %v254 = vsub.s32 1, %v253
      %v255 = vrot.slane %v245, %v254
      %v256 = vlaneseq
      %v257 = vshrl.u32 %v256, 7
      %v258 = vsub.s32 1, %v257
      %v259 = vrot.slane %v249, %v258
      %v260 = vmul.f32 %v240, %v255
      %v261 = vmul.f32 %v240, %v259
      %v262 = vadd.f32 %v236, %v260
      %v263 = vadd.f32 %v237, %v261
      %264 = vset.pattern.permute.xlu0 2
      %265 = vperm.xlu0 %264, %v211
      %v266 = vpop.permute.xlu0 %265
      %v268 = vlaneseq
      %v269 = vshrl.u32 %v268, 7
      %v270 = vsub.s32 2, %v269
      %v271 = vrot.slane %v210, %v270
      %v272 = vlaneseq
      %v273 = vshrl.u32 %v272, 7
      %v274 = vsub.s32 6, %v273
      %v275 = vrot.slane %v210, %v274
      %v278 = vlaneseq
      %v279 = vshrl.u32 %v278, 7
      %v280 = vsub.s32 2, %v279
      %v281 = vrot.slane %v271, %v280
      %v282 = vlaneseq
      %v283 = vshrl.u32 %v282, 7
      %v284 = vsub.s32 2, %v283
      %v285 = vrot.slane %v275, %v284
      %v286 = vmul.f32 %v266, %v281
      %v287 = vmul.f32 %v266, %v285
      %v288 = vadd.f32 %v262, %v286
      %v289 = vadd.f32 %v263, %v287
      %290 = vset.pattern.permute.xlu0 3
      %291 = vperm.xlu0 %290, %v211
      %v292 = vpop.permute.xlu0 %291
      %v294 = vlaneseq
      %v295 = vshrl.u32 %v294, 7
      %v296 = vsub.s32 3, %v295
      %v297 = vrot.slane %v210, %v296
      %v298 = vlaneseq
      %v299 = vshrl.u32 %v298, 7
      %v300 = vsub.s32 7, %v299
      %v301 = vrot.slane %v210, %v300
      %v304 = vlaneseq
      %v305 = vshrl.u32 %v304, 7
      %v306 = vsub.s32 3, %v305
      %v307 = vrot.slane %v297, %v306
      %v308 = vlaneseq
      %v309 = vshrl.u32 %v308, 7
      %v310 = vsub.s32 3, %v309
      %v311 = vrot.slane %v301, %v310
      %v312 = vmul.f32 %v292, %v307
      %v313 = vmul.f32 %v292, %v311
      %v314 = vadd.f32 %v288, %v312
      %v315 = vadd.f32 %v289, %v313
      %v316 = vld [vmem:[%s2] sm:$0xff]
      %318 = vset.pattern.permute.xlu0 0
      %319 = vperm.xlu0 %318, %v316
      %v320 = vpop.permute.xlu0 %319
      %v322 = vadd.f32 %v314, %v320
      %v323 = vadd.f32 %v315, %v320
      %324 = vst [vmem:[%s208] sm:$0xff] %v322
      %325 = vst [vmem:[%s208 + $0x8] sm:$0xff] %v323
      %s326 = smul.u32 2, %s19
      %p327 = scmp.lt.s32.totalorder %s18, 1
      %s328 = scalar_select %p327, %s18, 1
      %p329 = scmp.lt.s32.totalorder %s326, 1
      %s330 = scalar_select %p329, %s326, 1
      %s331 = smul.addr %s328, 2
      %s332 = sadd.s32 %s330, %s331
      %s333 = smul.addr %s332, 8
      %s334 = scalar_lea.vmem %s3, %s333
      // Predicated region
      $region33: #{upsample_forward.1} parent=31 // pred_check
        %p335 = pneg %p116
      $region34: #{upsample_forward.1} parent=31 // pred_check_branch
        %337 = sbr.rel (%p335) target = $region36
      $region35: #{upsample_forward.1} parent=31 // pred_region
        %s338 = smul.u32 2, %s19
      $region36: #{upsample_forward.1} parent=31 // pred_fallthru
        _
    $region32: #{upsample_forward.1} parent=5 // pred_fallthru
      _
    %p339 = scmp.le.s32.totalorder 2, %s9
    // Predicated region
    $region37: #{upsample_forward.1} parent=5 // pred_check
      %p340 = pneg %p339
    $region38: #{upsample_forward.1} parent=5 // pred_check_branch
      %342 = sbr.rel (%p340) target = $region40
    $region39: #{upsample_forward.1} parent=5 // pred_region
      %s343 = ssub.s32 %s9, 2
      // Predicated region
      $region41: #{upsample_forward.1} parent=39 // pred_check
        %p344 = pneg %p122
      $region42: #{upsample_forward.1} parent=39 // pred_check_branch
        %346 = sbr.rel (%p344) target = $region44
      $region43: #{upsample_forward.1} parent=39 // pred_region
        %s347 = smul.u32 2, %s21
        %p348 = scmp.lt.s32.totalorder %s20, 1
        %s349 = scalar_select %p348, %s20, 1
        %p350 = scmp.lt.s32.totalorder %s347, 1
        %s351 = scalar_select %p350, %s347, 1
        %s352 = smul.addr %s349, 2
        %s353 = sadd.s32 %s351, %s352
        %s354 = smul.addr %s353, 8
        %s355 = scalar_lea.vmem %s3, %s354
      $region44: #{upsample_forward.1} parent=39 // pred_fallthru
        _
    $region40: #{upsample_forward.1} parent=5 // pred_fallthru
      _
  $region6: #{upsample_forward.1} parent=0 // loop_footer
    %s13 = sadd.s32 1, %s9
  $region7: #{upsample_forward.1} parent=0 // loop_footer_branch
    %8 = sbr.rel target = $region3
  $region8: #{upsample_forward.1} parent=0 // loop_exit
    _

</llo_original>
